<compile_context>
chip_gen: v5e
topology: v5e:2x2
jax: 0.10.0
libtpu: 0.0.40
codegen_flags: <defaults>
</compile_context>

<pallas_src>
import functools

import jax
import jax.numpy as jnp
from jax import lax
from jax.experimental import pallas as pl
from jax.experimental.pallas import tpu as pltpu


def _round_up(a, m):
    return (a + m - 1) // m * m


def _pcen_kernel(par_ref, x_ref, o_ref, carry_ref, *, floor, t_grid_axis, use_sqrt):
    """Processes one (TT, LANES) time x lane tile.

    par_ref   : (8, LANES) f32, rows = [w, alpha, delta, oor, delta**oor, q=1-w, pad, pad]
    x_ref     : (TT, LANES) input dtype
    o_ref     : (TT, LANES) input dtype
    carry_ref : (1, LANES) f32 VMEM scratch -- EMA state carried across time blocks.
    """
    S = x_ref.shape[0]

    x = x_ref[...].astype(jnp.float32)                       # (S, LANES) f32 compute

    w     = par_ref[pl.ds(0, 1), :]                          # (1, LANES)
    alpha = par_ref[pl.ds(1, 1), :]
    delta = par_ref[pl.ds(2, 1), :]
    d_pow = par_ref[pl.ds(4, 1), :]                          # delta ** (1/root), hoisted
    q     = par_ref[pl.ds(5, 1), :]                          # 1 - w

    # m[0] = x[0]: seed the carry at the first time block of each lane block.
    @pl.when(pl.program_id(t_grid_axis) == 0)
    def _():
        carry_ref[...] = x[0:1, :]

    # Fold the carried EMA state into row 0:  b[0] = w*x[0] + q*carry,
    # b[t>0] = w*x[t].  The weighted inclusive scan
    #     m[t] = sum_{j<=t} q^(t-j) * b[j]
    # then reproduces the reference recurrence exactly (m == b after the scan),
    # so no per-row q-power table is needed.
    b = w * x
    b = jnp.concatenate([b[0:1, :] + q * carry_ref[...], b[1:, :]], axis=0)

    # Hillis-Steele weighted prefix scan: log2(S) static, fully unrolled steps.
    # At offset d only rows >= d change; the already-final prefix rows [0, d)
    # are spliced back verbatim (no zero-padded full-block shifted temporary,
    # no full-width select).  q^(2^k) is built by repeated squaring of the
    # (1, LANES) q row instead of a shipped (S, LANES) power table.
    d = 1
    q_d = q
    while d < S:
        b = jnp.concatenate([b[:d, :], b[d:, :] + q_d * b[:S - d, :]], axis=0)
        q_d = q_d * q_d
        d *= 2
    m = b
    carry_ref[...] = m[S - 1:S, :]                           # state for next time block

    # PCEN nonlinearity, divide-free:  x * (floor + m)^(-alpha) + delta.
    inv_pow = jnp.exp(-alpha * jnp.log(floor + m))
    base = x * inv_pow + delta
    if use_sqrt:                                             # static: every root == 2
        out = jnp.sqrt(base) - d_pow
    else:
        oor = par_ref[pl.ds(3, 1), :]                        # 1 / root
        out = jnp.exp(oor * jnp.log(base)) - d_pow
    o_ref[...] = out.astype(o_ref.dtype)


def _pick_time_tile(T):
    """Rows per time block.  Large blocks (>=128 rows of work per grid step)
    amortize DMA and per-step overhead; short sequences get a single unpadded
    block instead of 2-3x time padding.  Sweepable per generation: {64, 128, 256}."""
    if T <= 256:
        return _round_up(T, 8)                               # single time block
    t8 = _round_up(T, 8)
    return next((tt for tt in (256, 128, 64) if t8 % tt == 0), 128)


def _pick_lane_tile(width):
    """Lane-tile width for a 128-padded lane extent (multiple of 128).

    128-multiples only (unmasked, lane-dense stores), capped at 512 lanes
    (keeps double-buffered blocks small on every generation) and leaving >= 2
    lane blocks whenever possible so the parallel grid axis can be split
    across v7x's two TensorCores."""
    n128 = width // 128
    cap = max(1, min(4, n128 // 2)) if n128 >= 2 else 1
    j = next(jj for jj in range(cap, 0, -1) if n128 % jj == 0)
    return 128 * j


def _pad_tail(v, new_len, fill):
    if new_len == v.shape[0]:
        return v
    return jnp.concatenate([v, jnp.full((new_len - v.shape[0],), fill, v.dtype)])


def _param_slab(w, alpha, delta, oor, q):
    """Stack per-lane f32 parameters into one sublane-aligned (8, LANES) slab."""
    rows = jnp.stack([w, alpha, delta, oor, delta ** oor, q], axis=0)    # (6, LANES)
    return jnp.pad(rows, ((0, 2), (0, 0)))                               # (8, LANES)


def fp32_pcen(x, alpha, delta, root, ema_weights, *, floor=1e-12):
    """x: (B, T, C); alpha/delta/root/ema_weights: (C,).  Returns (B, T, C) in x.dtype."""
    B, T, C = x.shape

    # Per-channel parameters, clamped as in the reference, in f32.
    w_c   = jnp.clip(ema_weights.astype(jnp.float32), 0.0, 1.0)
    a_c   = jnp.minimum(alpha.astype(jnp.float32), 1.0)
    d_c   = delta.astype(jnp.float32)
    oor_c = 1.0 / jnp.maximum(root.astype(jnp.float32), 1.0)
    q_c   = 1.0 - w_c

    # Static fast path for the common PCEN default root == 2 (only usable when
    # `root` is concrete, i.e. the wrapper is not being jit-traced).
    try:
        use_sqrt = bool(jnp.all(oor_c == 0.5))
    except (jax.errors.ConcretizationTypeError, TypeError):
        use_sqrt = False

    TT = _pick_time_tile(T)
    Tp = _round_up(T, TT)
    log2_tt = max(1, (TT - 1).bit_length())
    itemsize = jnp.dtype(x.dtype).itemsize
    vmem_limit = 32 * 1024 * 1024            # explicit: v5e default scoped is only 16 MiB

    def _cost(par_size):
        return pl.CostEstimate(
            flops=(2 * log2_tt + 12) * B * T * C,
            transcendentals=(3 if use_sqrt else 4) * B * T * C,
            bytes_accessed=2 * B * T * C * itemsize + int(par_size) * 4)

    if C >= 128:
        # --- native (B, T, C) layout: no wrapper transpose; the pallas_call is
        # the only HBM traffic.  Channels padded to a 128-multiple with inert
        # parameters (w=1, alpha=1, delta=1, root=1 -> output exactly 0).
        Cp = _round_up(C, 128)
        TC = _pick_lane_tile(Cp)

        par = _param_slab(_pad_tail(w_c, Cp, 1.0), _pad_tail(a_c, Cp, 1.0),
                          _pad_tail(d_c, Cp, 1.0), _pad_tail(oor_c, Cp, 1.0),
                          _pad_tail(q_c, Cp, 0.0))
        xp = x if (Tp, Cp) == (T, C) else jnp.pad(
            x, ((0, 0), (0, Tp - T), (0, Cp - C)))

        out = pl.pallas_call(
            functools.partial(_pcen_kernel, floor=float(floor),
                              t_grid_axis=2, use_sqrt=use_sqrt),
            out_shape=jax.ShapeDtypeStruct((B, Tp, Cp), x.dtype),
            grid_spec=pltpu.PrefetchScalarGridSpec(
                num_scalar_prefetch=0,
                grid=(B, Cp // TC, Tp // TT),
                in_specs=[pl.BlockSpec((8, TC), lambda b, cb, tb: (0, cb)),
                          pl.BlockSpec((None, TT, TC),
                                       lambda b, cb, tb: (b, tb, cb))],
                out_specs=pl.BlockSpec((None, TT, TC),
                                       lambda b, cb, tb: (b, tb, cb)),
                scratch_shapes=[pltpu.VMEM((1, TC), jnp.float32)]),
            compiler_params=pltpu.CompilerParams(
                dimension_semantics=("parallel", "parallel", "arbitrary"),
                vmem_limit_bytes=vmem_limit),
            cost_estimate=_cost(par.size),
        )(par, xp)
        return out[:, :T, :C]

    # --- lane-dense (T, B*C) layout for narrow channel counts (C < 128) -------
    # All independent (b, c) recurrences share the lane axis so every load /
    # compute / store is full-lane; lanes padded to a 128-multiple with inert
    # parameters instead of running a partial-lane block.
    # TODO(synk): the (B, T, C) -> (T, B*C) remap is still a wrapper-side XLA
    # transpose; moving it on-chip needs an in-kernel relayout (pltpu.einshape)
    # of natural (B_blk, TT, C) blocks and is left for future tuning.
    N = B * C
    Np = _round_up(N, 128)
    TN = _pick_lane_tile(Np)

    def lanes(p, fill):                      # (C,) -> (Np,); lane n = b*C + c
        return _pad_tail(jnp.tile(p, B), Np, fill)

    par = _param_slab(lanes(w_c, 1.0), lanes(a_c, 1.0), lanes(d_c, 1.0),
                      lanes(oor_c, 1.0), lanes(q_c, 0.0))

    x2 = jnp.transpose(x, (1, 0, 2)).reshape(T, N)
    if (Tp, Np) != (T, N):
        x2 = jnp.pad(x2, ((0, Tp - T), (0, Np - N)))

    out = pl.pallas_call(
        functools.partial(_pcen_kernel, floor=float(floor),
                          t_grid_axis=1, use_sqrt=use_sqrt),
        out_shape=jax.ShapeDtypeStruct((Tp, Np), x.dtype),
        grid_spec=pltpu.PrefetchScalarGridSpec(
            num_scalar_prefetch=0,
            grid=(Np // TN, Tp // TT),
            in_specs=[pl.BlockSpec((8, TN), lambda nb, tb: (0, nb)),
                      pl.BlockSpec((TT, TN), lambda nb, tb: (tb, nb))],
            out_specs=pl.BlockSpec((TT, TN), lambda nb, tb: (tb, nb)),
            scratch_shapes=[pltpu.VMEM((1, TN), jnp.float32)]),
        compiler_params=pltpu.CompilerParams(
            dimension_semantics=("parallel", "arbitrary"),
            vmem_limit_bytes=vmem_limit),
        cost_estimate=_cost(par.size),
    )(par, x2)

    return jnp.transpose(out[:T, :N].reshape(T, B, C), (1, 0, 2))


def _reference_pcen(x, alpha, delta, root, ema_weights, floor=1e-12):
    """Pure-JAX reference mirroring the PyTorch Fp32PCEN module."""
    xf = x.astype(jnp.float32)
    a = jnp.minimum(alpha.astype(jnp.float32), 1.0)
    oor = 1.0 / jnp.maximum(root.astype(jnp.float32), 1.0)
    w = jnp.clip(ema_weights.astype(jnp.float32), 0.0, 1.0)
    d = delta.astype(jnp.float32)

    def step(acc, xt):                       # xt: (B, C)
        acc = w * xt + (1.0 - w) * acc
        return acc, acc

    _, ema = lax.scan(step, xf[:, 0, :], jnp.swapaxes(xf, 0, 1))
    ema = jnp.swapaxes(ema, 0, 1)            # (B, T, C)
    out = (xf / jnp.power(floor + ema, a) + d) ** oor - d ** oor
    return out.astype(x.dtype)


if __name__ == "__main__":
    key = jax.random.PRNGKey(0)

    # (B, T, C, root) -- exercises every kernel path at small shapes:
    #   1) C < 128   -> lane-dense (T, B*C) path, 3 time blocks (carry), sqrt path.
    #   2) C == 128  -> native (B, T, C) path, per-channel roots != 2 (exp/log path).
    #   3) C == 160  -> native path with channel padding to 256 lanes, 3 time blocks.
    configs = [(3, 300, 24, 2.0), (2, 50, 128, None), (2, 300, 160, 2.0)]

    for i, (B, T, C, root_val) in enumerate(configs):
        key, kx, ka, kw, kr = jax.random.split(key, 5)
        # PCEN is applied to non-negative energies (e.g. mel spectrogram bins).
        x = jax.random.uniform(kx, (B, T, C), dtype=jnp.float32)
        alpha = 0.9 + 0.08 * jax.random.uniform(ka, (C,), dtype=jnp.float32)
        delta = jnp.full((C,), 2.0, jnp.float32)
        if root_val is None:
            root = 2.0 + jax.random.uniform(kr, (C,), dtype=jnp.float32)
        else:
            root = jnp.full((C,), root_val, jnp.float32)
        ema_w = 0.04 + 0.02 * jax.random.uniform(kw, (C,), dtype=jnp.float32)

        out = jax.block_until_ready(fp32_pcen(x, alpha, delta, root, ema_w))
        ref = _reference_pcen(x, alpha, delta, root, ema_w)

        assert out.shape == x.shape and out.dtype == x.dtype
        err = float(jnp.max(jnp.abs(out.astype(jnp.float32) - ref.astype(jnp.float32))))
        assert jnp.allclose(out, ref, rtol=2e-2, atol=2e-3), (
            f"config {i} mismatch vs reference (max abs err {err:.3e})")

    print("KERNEL_OK")
</pallas_src>

<mosaic_0001>
module attributes {stable_mosaic.version = 11 : i64} {
  func.func @_pcen_kernel(%arg0: i32, %arg1: i32, %arg2: memref<8x128xf32, #tpu.memory_space<vmem>>, %arg3: memref<128x128xf32, #tpu.memory_space<vmem>>, %arg4: memref<128x128xf32, #tpu.memory_space<vmem>>, %arg5: memref<1x128xf32, #tpu.memory_space<vmem>>) attributes {dimension_semantics = [#tpu.dimension_semantics<parallel>, #tpu.dimension_semantics<arbitrary>], iteration_bounds = array<i64: 1, 3>, scalar_prefetch = 0 : i64, scratch_operands = 1 : i64, tpu.core_type = #tpu.core_type<tc>, window_params = [{transform_indices = @transform_0, window_bounds = array<i64: 8, 128>}, {transform_indices = @transform_1, window_bounds = array<i64: 128, 128>}, {transform_indices = @transform_2, window_bounds = array<i64: 128, 128>}]} {
    %c0 = arith.constant 0 : index
    %c0_0 = arith.constant 0 : index
    %0 = vector.load %arg3[%c0, %c0_0] : memref<128x128xf32, #tpu.memory_space<vmem>>, vector<128x128xf32>
    %c0_1 = arith.constant 0 : index
    %c0_2 = arith.constant 0 : index
    %1 = vector.load %arg2[%c0_1, %c0_2] : memref<8x128xf32, #tpu.memory_space<vmem>>, vector<1x128xf32>
    %c1 = arith.constant 1 : index
    %c0_3 = arith.constant 0 : index
    %2 = vector.load %arg2[%c1, %c0_3] : memref<8x128xf32, #tpu.memory_space<vmem>>, vector<1x128xf32>
    %c2 = arith.constant 2 : index
    %c0_4 = arith.constant 0 : index
    %3 = vector.load %arg2[%c2, %c0_4] : memref<8x128xf32, #tpu.memory_space<vmem>>, vector<1x128xf32>
    %c4 = arith.constant 4 : index
    %c0_5 = arith.constant 0 : index
    %4 = vector.load %arg2[%c4, %c0_5] : memref<8x128xf32, #tpu.memory_space<vmem>>, vector<1x128xf32>
    %c5 = arith.constant 5 : index
    %c0_6 = arith.constant 0 : index
    %5 = vector.load %arg2[%c5, %c0_6] : memref<8x128xf32, #tpu.memory_space<vmem>>, vector<1x128xf32>
    %c0_i32 = arith.constant 0 : i32
    %6 = arith.cmpi eq, %arg1, %c0_i32 : i32
    %7 = arith.extui %6 : i1 to i32
    %c0_i32_7 = arith.constant 0 : i32
    %8 = arith.cmpi ne, %7, %c0_i32_7 : i32
    scf.if %8 {
      %89 = vector.extract_strided_slice %0 {offsets = [0, 0], sizes = [1, 128], strides = [1, 1]} : vector<128x128xf32> to vector<1x128xf32>
      %c0_15 = arith.constant 0 : index
      %c0_16 = arith.constant 0 : index
      %90 = vector.load %arg5[%c0_15, %c0_16] : memref<1x128xf32, #tpu.memory_space<vmem>>, vector<1x128xf32>
      tpu.vector_store %arg5[%c0_15, %c0_16], %89 {strides = array<i32>} : memref<1x128xf32, #tpu.memory_space<vmem>>, vector<1x128xf32>,
    } else {
    }
    %9 = vector.broadcast %1 : vector<1x128xf32> to vector<128x128xf32>
    %10 = arith.mulf %9, %0 : vector<128x128xf32>
    %11 = vector.extract_strided_slice %10 {offsets = [0, 0], sizes = [1, 128], strides = [1, 1]} : vector<128x128xf32> to vector<1x128xf32>
    %c0_8 = arith.constant 0 : index
    %c0_9 = arith.constant 0 : index
    %12 = vector.load %arg5[%c0_8, %c0_9] : memref<1x128xf32, #tpu.memory_space<vmem>>, vector<1x128xf32>
    %13 = arith.mulf %5, %12 : vector<1x128xf32>
    %14 = arith.addf %11, %13 : vector<1x128xf32>
    %15 = vector.extract_strided_slice %10 {offsets = [1, 0], sizes = [127, 128], strides = [1, 1]} : vector<128x128xf32> to vector<127x128xf32>
    %16 = tpu.concatenate %14, %15 in 0 : vector<1x128xf32>, vector<127x128xf32> -> vector<128x128xf32>
    %17 = vector.extract_strided_slice %16 {offsets = [0, 0], sizes = [1, 128], strides = [1, 1]} : vector<128x128xf32> to vector<1x128xf32>
    %18 = vector.extract_strided_slice %16 {offsets = [1, 0], sizes = [127, 128], strides = [1, 1]} : vector<128x128xf32> to vector<127x128xf32>
    %19 = vector.extract_strided_slice %16 {offsets = [0, 0], sizes = [127, 128], strides = [1, 1]} : vector<128x128xf32> to vector<127x128xf32>
    %20 = vector.broadcast %5 : vector<1x128xf32> to vector<127x128xf32>
    %21 = arith.mulf %20, %19 : vector<127x128xf32>
    %22 = arith.addf %18, %21 : vector<127x128xf32>
    %23 = tpu.concatenate %17, %22 in 0 : vector<1x128xf32>, vector<127x128xf32> -> vector<128x128xf32>
    %24 = arith.mulf %5, %5 : vector<1x128xf32>
    %25 = vector.extract_strided_slice %23 {offsets = [0, 0], sizes = [2, 128], strides = [1, 1]} : vector<128x128xf32> to vector<2x128xf32>
    %26 = vector.extract_strided_slice %23 {offsets = [2, 0], sizes = [126, 128], strides = [1, 1]} : vector<128x128xf32> to vector<126x128xf32>
    %27 = vector.extract_strided_slice %23 {offsets = [0, 0], sizes = [126, 128], strides = [1, 1]} : vector<128x128xf32> to vector<126x128xf32>
    %28 = vector.broadcast %24 : vector<1x128xf32> to vector<126x128xf32>
    %29 = arith.mulf %28, %27 : vector<126x128xf32>
    %30 = arith.addf %26, %29 : vector<126x128xf32>
    %31 = tpu.concatenate %25, %30 in 0 : vector<2x128xf32>, vector<126x128xf32> -> vector<128x128xf32>
    %32 = arith.mulf %24, %24 : vector<1x128xf32>
    %33 = vector.extract_strided_slice %31 {offsets = [0, 0], sizes = [4, 128], strides = [1, 1]} : vector<128x128xf32> to vector<4x128xf32>
    %34 = vector.extract_strided_slice %31 {offsets = [4, 0], sizes = [124, 128], strides = [1, 1]} : vector<128x128xf32> to vector<124x128xf32>
    %35 = vector.extract_strided_slice %31 {offsets = [0, 0], sizes = [124, 128], strides = [1, 1]} : vector<128x128xf32> to vector<124x128xf32>
    %36 = vector.broadcast %32 : vector<1x128xf32> to vector<124x128xf32>
    %37 = arith.mulf %36, %35 : vector<124x128xf32>
    %38 = arith.addf %34, %37 : vector<124x128xf32>
    %39 = tpu.concatenate %33, %38 in 0 : vector<4x128xf32>, vector<124x128xf32> -> vector<128x128xf32>
    %40 = arith.mulf %32, %32 : vector<1x128xf32>
    %41 = vector.extract_strided_slice %39 {offsets = [0, 0], sizes = [8, 128], strides = [1, 1]} : vector<128x128xf32> to vector<8x128xf32>
    %42 = vector.extract_strided_slice %39 {offsets = [8, 0], sizes = [120, 128], strides = [1, 1]} : vector<128x128xf32> to vector<120x128xf32>
    %43 = vector.extract_strided_slice %39 {offsets = [0, 0], sizes = [120, 128], strides = [1, 1]} : vector<128x128xf32> to vector<120x128xf32>
    %44 = vector.broadcast %40 : vector<1x128xf32> to vector<120x128xf32>
    %45 = arith.mulf %44, %43 : vector<120x128xf32>
    %46 = arith.addf %42, %45 : vector<120x128xf32>
    %47 = tpu.concatenate %41, %46 in 0 : vector<8x128xf32>, vector<120x128xf32> -> vector<128x128xf32>
    %48 = arith.mulf %40, %40 : vector<1x128xf32>
    %49 = vector.extract_strided_slice %47 {offsets = [0, 0], sizes = [16, 128], strides = [1, 1]} : vector<128x128xf32> to vector<16x128xf32>
    %50 = vector.extract_strided_slice %47 {offsets = [16, 0], sizes = [112, 128], strides = [1, 1]} : vector<128x128xf32> to vector<112x128xf32>
    %51 = vector.extract_strided_slice %47 {offsets = [0, 0], sizes = [112, 128], strides = [1, 1]} : vector<128x128xf32> to vector<112x128xf32>
    %52 = vector.broadcast %48 : vector<1x128xf32> to vector<112x128xf32>
    %53 = arith.mulf %52, %51 : vector<112x128xf32>
    %54 = arith.addf %50, %53 : vector<112x128xf32>
    %55 = tpu.concatenate %49, %54 in 0 : vector<16x128xf32>, vector<112x128xf32> -> vector<128x128xf32>
    %56 = arith.mulf %48, %48 : vector<1x128xf32>
    %57 = vector.extract_strided_slice %55 {offsets = [0, 0], sizes = [32, 128], strides = [1, 1]} : vector<128x128xf32> to vector<32x128xf32>
    %58 = vector.extract_strided_slice %55 {offsets = [32, 0], sizes = [96, 128], strides = [1, 1]} : vector<128x128xf32> to vector<96x128xf32>
    %59 = vector.extract_strided_slice %55 {offsets = [0, 0], sizes = [96, 128], strides = [1, 1]} : vector<128x128xf32> to vector<96x128xf32>
    %60 = vector.broadcast %56 : vector<1x128xf32> to vector<96x128xf32>
    %61 = arith.mulf %60, %59 : vector<96x128xf32>
    %62 = arith.addf %58, %61 : vector<96x128xf32>
    %63 = tpu.concatenate %57, %62 in 0 : vector<32x128xf32>, vector<96x128xf32> -> vector<128x128xf32>
    %64 = arith.mulf %56, %56 : vector<1x128xf32>
    %65 = vector.extract_strided_slice %63 {offsets = [0, 0], sizes = [64, 128], strides = [1, 1]} : vector<128x128xf32> to vector<64x128xf32>
    %66 = vector.extract_strided_slice %63 {offsets = [64, 0], sizes = [64, 128], strides = [1, 1]} : vector<128x128xf32> to vector<64x128xf32>
    %67 = vector.extract_strided_slice %63 {offsets = [0, 0], sizes = [64, 128], strides = [1, 1]} : vector<128x128xf32> to vector<64x128xf32>
    %68 = vector.broadcast %64 : vector<1x128xf32> to vector<64x128xf32>
    %69 = arith.mulf %68, %67 : vector<64x128xf32>
    %70 = arith.addf %66, %69 : vector<64x128xf32>
    %71 = tpu.concatenate %65, %70 in 0 : vector<64x128xf32>, vector<64x128xf32> -> vector<128x128xf32>
    %72 = vector.extract_strided_slice %71 {offsets = [127, 0], sizes = [1, 128], strides = [1, 1]} : vector<128x128xf32> to vector<1x128xf32>
    %c0_10 = arith.constant 0 : index
    %c0_11 = arith.constant 0 : index
    %73 = vector.load %arg5[%c0_10, %c0_11] : memref<1x128xf32, #tpu.memory_space<vmem>>, vector<1x128xf32>
    tpu.vector_store %arg5[%c0_10, %c0_11], %72 {strides = array<i32>} : memref<1x128xf32, #tpu.memory_space<vmem>>, vector<1x128xf32>,
    %cst = arith.constant 0.000000e+00 : f32
    %74 = vector.broadcast %cst : f32 to vector<1x128xf32>
    %75 = arith.subf %74, %2 : vector<1x128xf32>
    %cst_12 = arith.constant 9.99999996E-13 : f32
    %76 = vector.broadcast %cst_12 : f32 to vector<128x128xf32>
    %77 = arith.addf %76, %71 : vector<128x128xf32>
    %78 = math.log %77 : vector<128x128xf32>
    %79 = vector.broadcast %75 : vector<1x128xf32> to vector<128x128xf32>
    %80 = arith.mulf %79, %78 : vector<128x128xf32>
    %81 = math.exp %80 : vector<128x128xf32>
    %82 = arith.mulf %0, %81 : vector<128x128xf32>
    %83 = vector.broadcast %3 : vector<1x128xf32> to vector<128x128xf32>
    %84 = arith.addf %82, %83 : vector<128x128xf32>
    %85 = math.sqrt %84 : vector<128x128xf32>
    %86 = vector.broadcast %4 : vector<1x128xf32> to vector<128x128xf32>
    %87 = arith.subf %85, %86 : vector<128x128xf32>
    %c0_13 = arith.constant 0 : index
    %c0_14 = arith.constant 0 : index
    %88 = vector.load %arg4[%c0_13, %c0_14] : memref<128x128xf32, #tpu.memory_space<vmem>>, vector<128x128xf32>
    tpu.vector_store %arg4[%c0_13, %c0_14], %87 {strides = array<i32>} : memref<128x128xf32, #tpu.memory_space<vmem>>, vector<128x128xf32>,
    return
  }
  func.func @transform_0(%arg0: i32, %arg1: i32) -> (i32, i32) {
    %c0_i32 = arith.constant 0 : i32
    %c0_i32_0 = arith.constant 0 : i32
    return %c0_i32, %arg0 : i32, i32
  }
  func.func @transform_1(%arg0: i32, %arg1: i32) -> (i32, i32) {
    %c0_i32 = arith.constant 0 : i32
    return %arg1, %arg0 : i32, i32
  }
  func.func @transform_2(%arg0: i32, %arg1: i32) -> (i32, i32) {
    %c0_i32 = arith.constant 0 : i32
    return %arg1, %arg0 : i32, i32
  }
}

</mosaic_0001>

<llo_original>
// kernel: tpu_custom_call.1
$region0: #{tpu_custom_call.1}
  #allocation0 [shape = 'u32[]', space=smem, size = 0x4, offset = 0x4, fixed_abs, tag = 'smem constant byte address 0x4 - core index']
  #allocation1 [shape = 'u32[72,128]{1,0:T(1,128)}', space=vmem, size = 0x9000, scoped, tag = 'internal scratch']
  #allocation2 [shape = 'f32[1,128]{1,0:T(1,128)}', space=vmem, size = 0x200, scoped, tag = 'scratch operand']
  %s0 = inlined_call_operand.hbm [shape: f32[8,128], index: 0, kind: input, shape index: {}]
  %s1 = inlined_call_operand.hbm [shape: f32[384,128], index: 1, kind: input, shape index: {}]
  %s2 = inlined_call_operand.hbm [shape: f32[384,128], index: 2, kind: output, shape index: {}]
  %s3 = sld [smem:[#allocation0]]
  $region53: #{tpu_custom_call.1} parent=0
    _
  %s5 = ssub.s32 1, %s3
  %s6 = scalar_select 0, %s5, %s3
  $region1: #{tpu_custom_call.1} parent=0
    #allocation3 [shape = 'u8[4096]{0}', space=vmem, size = 0x1000, scoped, tag = 'input window, operand 0, single buffered']
    #allocation4 [shape = 's32[2]{0}', space=sflag, size = 0x8, scoped, tag = 'scoped memory for tpu_custom_call.1']
    #allocation5 [shape = 's32[2]{0}', space=sflag, size = 0x8, scoped, tag = 'scoped memory for tpu_custom_call.1']
    #allocation6 [shape = 'u8[131072]{0}', space=vmem, size = 0x20000, scoped, tag = 'input window, operand 1']
    #allocation7 [shape = 's32[2]{0}', space=sflag, size = 0x8, scoped, tag = 'scoped memory for tpu_custom_call.1']
    #allocation8 [shape = 'u8[131072]{0}', space=vmem, size = 0x20000, scoped, tag = 'output window, operand 0']
    %7 = vsyncpa [#allocation4], 0
    %8 = vsyncpa [#allocation7], 0
    %s9 = scalar_lea.sflag [#allocation7], 1
    %10 = vsyncpa %s9, 0
    %11 = vsyncpa [#allocation5], 0
    %s12 = scalar_lea.sflag [#allocation5], 1
    %13 = vsyncpa %s12, 0
    loop: start=0, step=1, limit=5
    $region2: #{tpu_custom_call.1} parent=1 // loop_pre_header
      _
    $region3: #{tpu_custom_call.1} parent=1 // loop_header
      %s15 = sphi 0, %s19
      %p16 = scmp.ge.s32.totalorder %s15, 5
      %s22 = sphi 0, %s34
      %s23 = sphi 0, %s30
      %s24 = sphi 0, %s22
      %s25 = sphi 0, %s23
      %s26 = sphi 0, %s24
      %s27 = sphi 0, %s25
      %s37 = sphi 0, %s39
      %s40 = sphi 0, %s37
      %s41 = sphi 0, %s40
      %s57 = sphi 0, %s41
      %s65 = sphi 0, %s67
      %s68 = sphi 0, %s65
      %s69 = sphi 0, %s68
      %s85 = sphi 0, %s69
      %s93 = sphi 0, %s95
      %s96 = sphi 0, %s93
      %s97 = sphi 0, %s96
      %s113 = sphi 0, %s97
    $region4: #{tpu_custom_call.1} parent=1 // loop_header_branch
      %18 = sbr.rel (%p16) target = $region8
    $region5: #{tpu_custom_call.1} parent=1 // loop_body
      %s20 = ssub.s32 %s15, 1
      %s21 = ssub.s32 %s15, 2
      %s28 = sadd.s32 1, %s23
      %p29 = scmp.ge.s32.totalorder %s28, 3
      %s30 = scalar_select %p29, 0, %s28
      %s31 = sadd.s32 1, %s22
      %s32 = scalar_select %p29, %s31, %s22
      %p33 = scmp.ge.s32.totalorder %s32, 1
      %s34 = scalar_select %p33, 0, %s32
      %s35 = ssub.s32 %s22, %s34
      %p36 = scmp.eq.s32.totalorder %s35, 0
      %s38 = sadd.s32 %s37, 1
      %s39 = scalar_select %p36, %s37, %s38
      %p42 = pneg %p36
      %p43 = scmp.eq.s32.totalorder %s15, 2
      %p44 = por %p42, %p43
      %p45 = scmp.ne.s32.totalorder %s37, %s40
      %p46 = scmp.eq.s32.totalorder %s15, 0
      %p47 = por %p45, %p46
      %p48 = scmp.ne.s32.totalorder %s37, %s40
      %p49 = scmp.eq.s32.totalorder %s20, 2
      %p50 = por %p48, %p49
      %p51 = scmp.ne.s32.totalorder %s40, %s41
      %p52 = scmp.eq.s32.totalorder %s20, 0
      %p53 = por %p51, %p52
      %p54 = scmp.ne.s32.totalorder %s40, %s41
      %p55 = scmp.eq.s32.totalorder %s21, 2
      %p56 = por %p54, %p55
      %p58 = scmp.ne.s32.totalorder %s41, %s57
      %p59 = scmp.eq.s32.totalorder %s21, 0
      %p60 = por %p58, %p59
      %s61 = ssub.s32 %s23, %s30
      %s62 = ssub.s32 %s22, %s34
      %s63 = sor.u32 %s61, %s62
      %p64 = scmp.eq.s32.totalorder %s63, 0
      %s66 = sadd.s32 %s65, 1
      %s67 = scalar_select %p64, %s65, %s66
      %p70 = pneg %p64
      %p71 = scmp.eq.s32.totalorder %s15, 2
      %p72 = por %p70, %p71
      %p73 = scmp.ne.s32.totalorder %s65, %s68
      %p74 = scmp.eq.s32.totalorder %s15, 0
      %p75 = por %p73, %p74
      %p76 = scmp.ne.s32.totalorder %s65, %s68
      %p77 = scmp.eq.s32.totalorder %s20, 2
      %p78 = por %p76, %p77
      %p79 = scmp.ne.s32.totalorder %s68, %s69
      %p80 = scmp.eq.s32.totalorder %s20, 0
      %p81 = por %p79, %p80
      %p82 = scmp.ne.s32.totalorder %s68, %s69
      %p83 = scmp.eq.s32.totalorder %s21, 2
      %p84 = por %p82, %p83
      %p86 = scmp.ne.s32.totalorder %s69, %s85
      %p87 = scmp.eq.s32.totalorder %s21, 0
      %p88 = por %p86, %p87
      %s89 = ssub.s32 %s23, %s30
      %s90 = ssub.s32 %s22, %s34
      %s91 = sor.u32 %s89, %s90
      %p92 = scmp.eq.s32.totalorder %s91, 0
      %s94 = sadd.s32 %s93, 1
      %s95 = scalar_select %p92, %s93, %s94
      %p98 = pneg %p92
      %p99 = scmp.eq.s32.totalorder %s15, 2
      %p100 = por %p98, %p99
      %p101 = scmp.ne.s32.totalorder %s93, %s96
      %p102 = scmp.eq.s32.totalorder %s15, 0
      %p103 = por %p101, %p102
      %p104 = scmp.ne.s32.totalorder %s93, %s96
      %p105 = scmp.eq.s32.totalorder %s20, 2
      %p106 = por %p104, %p105
      %p107 = scmp.ne.s32.totalorder %s96, %s97
      %p108 = scmp.eq.s32.totalorder %s20, 0
      %p109 = por %p107, %p108
      %p110 = scmp.ne.s32.totalorder %s96, %s97
      %p111 = scmp.eq.s32.totalorder %s21, 2
      %p112 = por %p110, %p111
      %p114 = scmp.ne.s32.totalorder %s97, %s113
      %p115 = scmp.eq.s32.totalorder %s21, 0
      %p116 = por %p114, %p115
      %p117 = scmp.le.s32.totalorder 1, %s15
      %p118 = scmp.lt.s32.totalorder %s15, 4
      %p119 = pnand %p117, %p118
      %p120 = pneg %p119
      // Predicated region
      $region9: #{tpu_custom_call.1} parent=5 // pred_check
        _
      $region10: #{tpu_custom_call.1} parent=5 // pred_check_branch
        %122 = sbr.rel (%p119) target = $region12
      $region11: #{tpu_custom_call.1} parent=5 // pred_region
        %s123 = ssub.s32 %s15, 1
        // Predicated region
        $region13: #{tpu_custom_call.1} parent=11 // pred_check
          %p124 = pneg %p53
        $region14: #{tpu_custom_call.1} parent=11 // pred_check_branch
          %126 = sbr.rel (%p124) target = $region16
        $region15: #{tpu_custom_call.1} parent=11 // pred_region
          %128 = vsyncadd [#allocation4], 0
          %s129 = smul.addr %s24, 8
          %s130 = scalar_lea.hbm %s0, %s129
          %s132 = sshll.u32 %s130, 4
          %s133 = int_to_ptr.hbm [resolvable:$true] %s132
          %s134 = sshll.u32 [#allocation3], 4
          %s135 = int_to_ptr.vmem [resolvable:$true] %s134
          %137 = dma.hbm_to_vmem [thread:$0]  %s133, 128, %s135, [#allocation4]
        $region16: #{tpu_custom_call.1} parent=11 // pred_fallthru
          _
      $region12: #{tpu_custom_call.1} parent=5 // pred_fallthru
        _
      %p138 = scmp.lt.s32.totalorder %s15, 3
      // Predicated region
      $region17: #{tpu_custom_call.1} parent=5 // pred_check
        %p139 = pneg %p138
      $region18: #{tpu_custom_call.1} parent=5 // pred_check_branch
        %141 = sbr.rel (%p139) target = $region20
      $region19: #{tpu_custom_call.1} parent=5 // pred_region
        // Predicated region
        $region21: #{tpu_custom_call.1} parent=19 // pred_check
          %p142 = pneg %p75
        $region22: #{tpu_custom_call.1} parent=19 // pred_check_branch
          %144 = sbr.rel (%p142) target = $region24
        $region23: #{tpu_custom_call.1} parent=19 // pred_region
          %s145 = sand.u32 %s65, 1
          %s146 = scalar_lea.sflag [#allocation7], %s145
          %s147 = sand.u32 %s65, 1
          %s148 = smul.addr %s147, 128
          %s149 = scalar_lea.vmem [#allocation6], %s148
          %s150 = smul.u32 16, %s23
          %152 = vsyncadd %s146, 0
          %s153 = sadd.s32 %s22, %s150
          %s154 = smul.addr %s153, 8
          %s155 = scalar_lea.hbm %s1, %s154
          %s156 = sshll.u32 %s155, 4
          %s157 = int_to_ptr.hbm [resolvable:$true] %s156
          %s158 = sshll.u32 %s149, 4
          %s159 = int_to_ptr.vmem [resolvable:$true] %s158
          %164 = dma.hbm_to_vmem [thread:$0]  %s157, 2048, %s159, %s146, 128, 128, 8
        $region24: #{tpu_custom_call.1} parent=19 // pred_fallthru
          _
      $region20: #{tpu_custom_call.1} parent=5 // pred_fallthru
        _
      %p165 = scmp.le.s32.totalorder 1, %s15
      %p166 = scmp.lt.s32.totalorder %s15, 4
      %p167 = pnand %p165, %p166
      %p168 = pneg %p167
      // Predicated region
      $region25: #{tpu_custom_call.1} parent=5 // pred_check
        _
      $region26: #{tpu_custom_call.1} parent=5 // pred_check_branch
        %170 = sbr.rel (%p167) target = $region28
      $region27: #{tpu_custom_call.1} parent=5 // pred_region
        %s171 = ssub.s32 %s15, 1
        // Predicated region
        $region29: #{tpu_custom_call.1} parent=27 // pred_check
          %p172 = pneg %p53
        $region30: #{tpu_custom_call.1} parent=27 // pred_check_branch
          %174 = sbr.rel (%p172) target = $region32
        $region31: #{tpu_custom_call.1} parent=27 // pred_region
          %176 = dma.done [#allocation4], 128
        $region32: #{tpu_custom_call.1} parent=27 // pred_fallthru
          _
        %s177 = sand.u32 %s68, 1
        %s178 = scalar_lea.sflag [#allocation7], %s177
        %s179 = sand.u32 %s68, 1
        %s180 = smul.addr %s179, 128
        %s181 = scalar_lea.vmem [#allocation6], %s180
        // Predicated region
        $region33: #{tpu_custom_call.1} parent=27 // pred_check
          %p182 = pneg %p81
        $region34: #{tpu_custom_call.1} parent=27 // pred_check_branch
          %184 = sbr.rel (%p182) target = $region36
        $region35: #{tpu_custom_call.1} parent=27 // pred_region
          %186 = dma.done %s178, 2048
        $region36: #{tpu_custom_call.1} parent=27 // pred_fallthru
          _
        %p187 = pneg %p53
        %p188 = pneg %p50
        %s189 = sand.u32 %s68, 1
        %s190 = scalar_lea.sflag [#allocation7], %s189
        %s191 = sand.u32 %s68, 1
        %s192 = smul.addr %s191, 128
        %s193 = scalar_lea.vmem [#allocation6], %s192
        %p194 = pneg %p81
        %p195 = pneg %p78
        %p196 = pneg %p109
        %p197 = pneg %p106
        %s198 = sand.u32 %s96, 1
        %s199 = scalar_lea.sflag [#allocation5], %s198
        %s200 = sand.u32 %s96, 1
        %s201 = smul.addr %s200, 128
        %s202 = scalar_lea.vmem [#allocation8], %s201
        %s203 = smul.u32 16, %s25
        %s204 = smul.u32 16, %s25
        %v205 = vld [vmem:[%s181] sm:$0xff]
        %v206 = vld [vmem:[%s181 + $0x8] sm:$0xff]
        %v207 = vld [vmem:[%s181 + $0x10] sm:$0xff]
        %v208 = vld [vmem:[%s181 + $0x18] sm:$0xff]
        %v209 = vld [vmem:[%s181 + $0x20] sm:$0xff]
        %v210 = vld [vmem:[%s181 + $0x28] sm:$0xff]
        %v211 = vld [vmem:[%s181 + $0x30] sm:$0xff]
        %v212 = vld [vmem:[%s181 + $0x38] sm:$0xff]
        %v213 = vld [vmem:[%s181 + $0x40] sm:$0xff]
        %v214 = vld [vmem:[%s181 + $0x48] sm:$0xff]
        %v215 = vld [vmem:[%s181 + $0x50] sm:$0xff]
        %v216 = vld [vmem:[%s181 + $0x58] sm:$0xff]
        %v217 = vld [vmem:[%s181 + $0x60] sm:$0xff]
        %v218 = vld [vmem:[%s181 + $0x68] sm:$0xff]
        %v219 = vld [vmem:[%s181 + $0x70] sm:$0xff]
        %v220 = vld [vmem:[%s181 + $0x78] sm:$0xff]
        %v221 = vld [vmem:[#allocation3] sm:$0x1]
        %v222 = vld [vmem:[#allocation3 + $0x1] sm:$0x1]
        %v223 = vld [vmem:[#allocation3 + $0x2] sm:$0x1]
        %v224 = vld [vmem:[#allocation3 + $0x4] sm:$0x1]
        %v225 = vld [vmem:[#allocation3 + $0x5] sm:$0x1]
        %p226 = scmp.eq.s32.totalorder %s25, 0
        // Predicated region
        $region37: #{tpu_custom_call.1} parent=27 // pred_check
          %p227 = pneg %p226
        $region38: #{tpu_custom_call.1} parent=27 // pred_check_branch
          %229 = sbr.rel (%p227) target = $region40
        $region39: #{tpu_custom_call.1} parent=27 // pred_region
          %230 = vst [vmem:[#allocation2] sm:$0x1] %v205
        $region40: #{tpu_custom_call.1} parent=27 // pred_fallthru
          _
        %v231 = vperm.slane %v221, 0
        %v232 = vmul.f32 %v231, %v205
        %v233 = vmul.f32 %v231, %v206
        %v234 = vmul.f32 %v231, %v207
        %v235 = vmul.f32 %v231, %v208
        %v236 = vmul.f32 %v231, %v209
        %v237 = vmul.f32 %v231, %v210
        %v238 = vmul.f32 %v231, %v211
        %v239 = vmul.f32 %v231, %v212
        %v240 = vmul.f32 %v231, %v213
        %v241 = vmul.f32 %v231, %v214
        %v242 = vmul.f32 %v231, %v215
        %v243 = vmul.f32 %v231, %v216
        %v244 = vmul.f32 %v231, %v217
        %v245 = vmul.f32 %v231, %v218
        %v246 = vmul.f32 %v231, %v219
        %v247 = vmul.f32 %v231, %v220
        %v248 = vld [vmem:[#allocation2] sm:$0x1]
        %v249 = vmul.f32 %v225, %v248
        %v250 = vadd.f32 %v232, %v249
        %vm251 = vcmask 1040384
        %v252 = vsel %vm251, %v250, %v232
        %v253 = vperm.slane %v225, 0
        %v254 = vmul.f32 %v253, %v252
        %v255 = vmul.f32 %v253, %v233
        %v256 = vmul.f32 %v253, %v234
        %v257 = vmul.f32 %v253, %v235
        %v258 = vmul.f32 %v253, %v236
        %v259 = vmul.f32 %v253, %v237
        %v260 = vmul.f32 %v253, %v238
        %v261 = vmul.f32 %v253, %v239
        %v262 = vmul.f32 %v253, %v240
        %v263 = vmul.f32 %v253, %v241
        %v264 = vmul.f32 %v253, %v242
        %v265 = vmul.f32 %v253, %v243
        %v266 = vmul.f32 %v253, %v244
        %v267 = vmul.f32 %v253, %v245
        %v268 = vmul.f32 %v253, %v246
        %v269 = vmul.f32 %v253, %v247
        %v286 = vrot.slane %v254, 7
        %v287 = vrot.slane %v255, 7
        %v288 = vsel %vm251, %v286, %v287
        %v289 = vrot.slane %v256, 7
        %v290 = vsel %vm251, %v287, %v289
        %v291 = vrot.slane %v257, 7
        %v292 = vsel %vm251, %v289, %v291
        %v293 = vrot.slane %v258, 7
        %v294 = vsel %vm251, %v291, %v293
        %v295 = vrot.slane %v259, 7
        %v296 = vsel %vm251, %v293, %v295
        %v297 = vrot.slane %v260, 7
        %v298 = vsel %vm251, %v295, %v297
        %v299 = vrot.slane %v261, 7
        %v300 = vsel %vm251, %v297, %v299
        %v301 = vrot.slane %v262, 7
        %v302 = vsel %vm251, %v299, %v301
        %v303 = vrot.slane %v263, 7
        %v304 = vsel %vm251, %v301, %v303
        %v305 = vrot.slane %v264, 7
        %v306 = vsel %vm251, %v303, %v305
        %v307 = vrot.slane %v265, 7
        %v308 = vsel %vm251, %v305, %v307
        %v309 = vrot.slane %v266, 7
        %v310 = vsel %vm251, %v307, %v309
        %v311 = vrot.slane %v267, 7
        %v312 = vsel %vm251, %v309, %v311
        %v313 = vrot.slane %v268, 7
        %v314 = vsel %vm251, %v311, %v313
        %v315 = vrot.slane %v269, 7
        %v316 = vsel %vm251, %v313, %v315
        %v333 = vadd.f32 %v252, %v286
        %v334 = vadd.f32 %v233, %v288
        %v335 = vadd.f32 %v234, %v290
        %v336 = vadd.f32 %v235, %v292
        %v337 = vadd.f32 %v236, %v294
        %v338 = vadd.f32 %v237, %v296
        %v339 = vadd.f32 %v238, %v298
        %v340 = vadd.f32 %v239, %v300
        %v341 = vadd.f32 %v240, %v302
        %v342 = vadd.f32 %v241, %v304
        %v343 = vadd.f32 %v242, %v306
        %v344 = vadd.f32 %v243, %v308
        %v345 = vadd.f32 %v244, %v310
        %v346 = vadd.f32 %v245, %v312
        %v347 = vadd.f32 %v246, %v314
        %v348 = vadd.f32 %v247, %v316
        %v349 = vsel %vm251, %v252, %v333
        %v350 = vmul.f32 %v225, %v225
        %v351 = vperm.slane %v350, 0
        %v352 = vmul.f32 %v351, %v349
        %v353 = vmul.f32 %v351, %v334
        %v354 = vmul.f32 %v351, %v335
        %v355 = vmul.f32 %v351, %v336
        %v356 = vmul.f32 %v351, %v337
        %v357 = vmul.f32 %v351, %v338
        %v358 = vmul.f32 %v351, %v339
        %v359 = vmul.f32 %v351, %v340
        %v360 = vmul.f32 %v351, %v341
        %v361 = vmul.f32 %v351, %v342
        %v362 = vmul.f32 %v351, %v343
        %v363 = vmul.f32 %v351, %v344
        %v364 = vmul.f32 %v351, %v345
        %v365 = vmul.f32 %v351, %v346
        %v366 = vmul.f32 %v351, %v347
        %v367 = vmul.f32 %v351, %v348
        %vm384 = vcmask 1041408
        %v385 = vrot.slane %v352, 6
        %v386 = vrot.slane %v353, 6
        %v387 = vsel %vm384, %v385, %v386
        %v388 = vrot.slane %v354, 6
        %v389 = vsel %vm384, %v386, %v388
        %v390 = vrot.slane %v355, 6
        %v391 = vsel %vm384, %v388, %v390
        %v392 = vrot.slane %v356, 6
        %v393 = vsel %vm384, %v390, %v392
        %v394 = vrot.slane %v357, 6
        %v395 = vsel %vm384, %v392, %v394
        %v396 = vrot.slane %v358, 6
        %v397 = vsel %vm384, %v394, %v396
        %v398 = vrot.slane %v359, 6
        %v399 = vsel %vm384, %v396, %v398
        %v400 = vrot.slane %v360, 6
        %v401 = vsel %vm384, %v398, %v400
        %v402 = vrot.slane %v361, 6
        %v403 = vsel %vm384, %v400, %v402
        %v404 = vrot.slane %v362, 6
        %v405 = vsel %vm384, %v402, %v404
        %v406 = vrot.slane %v363, 6
        %v407 = vsel %vm384, %v404, %v406
        %v408 = vrot.slane %v364, 6
        %v409 = vsel %vm384, %v406, %v408
        %v410 = vrot.slane %v365, 6
        %v411 = vsel %vm384, %v408, %v410
        %v412 = vrot.slane %v366, 6
        %v413 = vsel %vm384, %v410, %v412
        %v414 = vrot.slane %v367, 6
        %v415 = vsel %vm384, %v412, %v414
        %v432 = vadd.f32 %v349, %v385
        %v433 = vadd.f32 %v334, %v387
        %v434 = vadd.f32 %v335, %v389
        %v435 = vadd.f32 %v336, %v391
        %v436 = vadd.f32 %v337, %v393
        %v437 = vadd.f32 %v338, %v395
        %v438 = vadd.f32 %v339, %v397
        %v439 = vadd.f32 %v340, %v399
        %v440 = vadd.f32 %v341, %v401
        %v441 = vadd.f32 %v342, %v403
        %v442 = vadd.f32 %v343, %v405
        %v443 = vadd.f32 %v344, %v407
        %v444 = vadd.f32 %v345, %v409
        %v445 = vadd.f32 %v346, %v411
        %v446 = vadd.f32 %v347, %v413
        %v447 = vadd.f32 %v348, %v415
        %v448 = vsel %vm384, %v349, %v432
        %v449 = vmul.f32 %v350, %v350
        %v450 = vperm.slane %v449, 0
        %v451 = vmul.f32 %v450, %v448
        %v452 = vmul.f32 %v450, %v433
        %v453 = vmul.f32 %v450, %v434
        %v454 = vmul.f32 %v450, %v435
        %v455 = vmul.f32 %v450, %v436
        %v456 = vmul.f32 %v450, %v437
        %v457 = vmul.f32 %v450, %v438
        %v458 = vmul.f32 %v450, %v439
        %v459 = vmul.f32 %v450, %v440
        %v460 = vmul.f32 %v450, %v441
        %v461 = vmul.f32 %v450, %v442
        %v462 = vmul.f32 %v450, %v443
        %v463 = vmul.f32 %v450, %v444
        %v464 = vmul.f32 %v450, %v445
        %v465 = vmul.f32 %v450, %v446
        %v466 = vmul.f32 %v450, %v447
        %vm483 = vcmask 1043456
        %v484 = vrot.slane %v451, 4
        %v485 = vrot.slane %v452, 4
        %v486 = vsel %vm483, %v484, %v485
        %v487 = vrot.slane %v453, 4
        %v488 = vsel %vm483, %v485, %v487
        %v489 = vrot.slane %v454, 4
        %v490 = vsel %vm483, %v487, %v489
        %v491 = vrot.slane %v455, 4
        %v492 = vsel %vm483, %v489, %v491
        %v493 = vrot.slane %v456, 4
        %v494 = vsel %vm483, %v491, %v493
        %v495 = vrot.slane %v457, 4
        %v496 = vsel %vm483, %v493, %v495
        %v497 = vrot.slane %v458, 4
        %v498 = vsel %vm483, %v495, %v497
        %v499 = vrot.slane %v459, 4
        %v500 = vsel %vm483, %v497, %v499
        %v501 = vrot.slane %v460, 4
        %v502 = vsel %vm483, %v499, %v501
        %v503 = vrot.slane %v461, 4
        %v504 = vsel %vm483, %v501, %v503
        %v505 = vrot.slane %v462, 4
        %v506 = vsel %vm483, %v503, %v505
        %v507 = vrot.slane %v463, 4
        %v508 = vsel %vm483, %v505, %v507
        %v509 = vrot.slane %v464, 4
        %v510 = vsel %vm483, %v507, %v509
        %v511 = vrot.slane %v465, 4
        %v512 = vsel %vm483, %v509, %v511
        %v513 = vrot.slane %v466, 4
        %v514 = vsel %vm483, %v511, %v513
        %v531 = vadd.f32 %v448, %v484
        %v532 = vadd.f32 %v433, %v486
        %v533 = vadd.f32 %v434, %v488
        %v534 = vadd.f32 %v435, %v490
        %v535 = vadd.f32 %v436, %v492
        %v536 = vadd.f32 %v437, %v494
        %v537 = vadd.f32 %v438, %v496
        %v538 = vadd.f32 %v439, %v498
        %v539 = vadd.f32 %v440, %v500
        %v540 = vadd.f32 %v441, %v502
        %v541 = vadd.f32 %v442, %v504
        %v542 = vadd.f32 %v443, %v506
        %v543 = vadd.f32 %v444, %v508
        %v544 = vadd.f32 %v445, %v510
        %v545 = vadd.f32 %v446, %v512
        %v546 = vadd.f32 %v447, %v514
        %v547 = vsel %vm483, %v448, %v531
        %v548 = vmul.f32 %v449, %v449
        %v549 = vperm.slane %v548, 0
        %v550 = vmul.f32 %v549, %v547
        %v551 = vmul.f32 %v549, %v532
        %v552 = vmul.f32 %v549, %v533
        %v553 = vmul.f32 %v549, %v534
        %v554 = vmul.f32 %v549, %v535
        %v555 = vmul.f32 %v549, %v536
        %v556 = vmul.f32 %v549, %v537
        %v557 = vmul.f32 %v549, %v538
        %v558 = vmul.f32 %v549, %v539
        %v559 = vmul.f32 %v549, %v540
        %v560 = vmul.f32 %v549, %v541
        %v561 = vmul.f32 %v549, %v542
        %v562 = vmul.f32 %v549, %v543
        %v563 = vmul.f32 %v549, %v544
        %v564 = vmul.f32 %v549, %v545
        %v565 = vadd.f32 %v532, %v550
        %v566 = vadd.f32 %v533, %v551
        %v567 = vadd.f32 %v534, %v552
        %v568 = vadd.f32 %v535, %v553
        %v569 = vadd.f32 %v536, %v554
        %v570 = vadd.f32 %v537, %v555
        %v571 = vadd.f32 %v538, %v556
        %v572 = vadd.f32 %v539, %v557
        %v573 = vadd.f32 %v540, %v558
        %v574 = vadd.f32 %v541, %v559
        %v575 = vadd.f32 %v542, %v560
        %v576 = vadd.f32 %v543, %v561
        %v577 = vadd.f32 %v544, %v562
        %v578 = vadd.f32 %v545, %v563
        %v579 = vadd.f32 %v546, %v564
        %v580 = vmul.f32 %v548, %v548
        %v581 = vperm.slane %v580, 0
        %v582 = vmul.f32 %v581, %v547
        %v583 = vmul.f32 %v581, %v565
        %v584 = vmul.f32 %v581, %v566
        %v585 = vmul.f32 %v581, %v567
        %v586 = vmul.f32 %v581, %v568
        %v587 = vmul.f32 %v581, %v569
        %v588 = vmul.f32 %v581, %v570
        %v589 = vmul.f32 %v581, %v571
        %v590 = vmul.f32 %v581, %v572
        %v591 = vmul.f32 %v581, %v573
        %v592 = vmul.f32 %v581, %v574
        %v593 = vmul.f32 %v581, %v575
        %v594 = vmul.f32 %v581, %v576
        %v595 = vmul.f32 %v581, %v577
        %v596 = vadd.f32 %v566, %v582
        %v597 = vadd.f32 %v567, %v583
        %v598 = vadd.f32 %v568, %v584
        %v599 = vadd.f32 %v569, %v585
        %v600 = vadd.f32 %v570, %v586
        %v601 = vadd.f32 %v571, %v587
        %v602 = vadd.f32 %v572, %v588
        %v603 = vadd.f32 %v573, %v589
        %v604 = vadd.f32 %v574, %v590
        %v605 = vadd.f32 %v575, %v591
        %v606 = vadd.f32 %v576, %v592
        %v607 = vadd.f32 %v577, %v593
        %v608 = vadd.f32 %v578, %v594
        %v609 = vadd.f32 %v579, %v595
        %v610 = vmul.f32 %v580, %v580
        %v611 = vperm.slane %v610, 0
        %v612 = vmul.f32 %v611, %v547
        %v613 = vmul.f32 %v611, %v565
        %v614 = vmul.f32 %v611, %v596
        %v615 = vmul.f32 %v611, %v597
        %v616 = vmul.f32 %v611, %v598
        %v617 = vmul.f32 %v611, %v599
        %v618 = vmul.f32 %v611, %v600
        %v619 = vmul.f32 %v611, %v601
        %v620 = vmul.f32 %v611, %v602
        %v621 = vmul.f32 %v611, %v603
        %v622 = vmul.f32 %v611, %v604
        %v623 = vmul.f32 %v611, %v605
        %v624 = vadd.f32 %v598, %v612
        %v625 = vadd.f32 %v599, %v613
        %v626 = vadd.f32 %v600, %v614
        %v627 = vadd.f32 %v601, %v615
        %v628 = vadd.f32 %v602, %v616
        %v629 = vadd.f32 %v603, %v617
        %v630 = vadd.f32 %v604, %v618
        %v631 = vadd.f32 %v605, %v619
        %v632 = vadd.f32 %v606, %v620
        %v633 = vadd.f32 %v607, %v621
        %v634 = vadd.f32 %v608, %v622
        %v635 = vadd.f32 %v609, %v623
        %v636 = vmul.f32 %v610, %v610
        %v637 = vperm.slane %v636, 0
        %v638 = vmul.f32 %v637, %v547
        %v639 = vmul.f32 %v637, %v565
        %v640 = vmul.f32 %v637, %v596
        %v641 = vmul.f32 %v637, %v597
        %v642 = vmul.f32 %v637, %v624
        %v643 = vmul.f32 %v637, %v625
        %v644 = vmul.f32 %v637, %v626
        %v645 = vmul.f32 %v637, %v627
        %v646 = vadd.f32 %v628, %v638
        %v647 = vadd.f32 %v629, %v639
        %v648 = vadd.f32 %v630, %v640
        %v649 = vadd.f32 %v631, %v641
        %v650 = vadd.f32 %v632, %v642
        %v651 = vadd.f32 %v633, %v643
        %v652 = vadd.f32 %v634, %v644
        %v653 = vadd.f32 %v635, %v645
        %654 = vst [vmem:[#allocation2 - $0x7] sm:$0x80] %v653
        %v655 = vsub.f32 0.0, %v222
        %v656 = vadd.f32 %v547, 1e-12
        %v657 = vadd.f32 %v565, 1e-12
        %v658 = vadd.f32 %v596, 1e-12
        %v659 = vadd.f32 %v597, 1e-12
        %v660 = vadd.f32 %v624, 1e-12
        %v661 = vadd.f32 %v625, 1e-12
        %v662 = vadd.f32 %v626, 1e-12
        %v663 = vadd.f32 %v627, 1e-12
        %v664 = vadd.f32 %v646, 1e-12
        %v665 = vadd.f32 %v647, 1e-12
        %v666 = vadd.f32 %v648, 1e-12
        %v667 = vadd.f32 %v649, 1e-12
        %v668 = vadd.f32 %v650, 1e-12
        %v669 = vadd.f32 %v651, 1e-12
        %v670 = vadd.f32 %v652, 1e-12
        %v671 = vadd.f32 %v653, 1e-12
        %v672 = vlog2.pop %v656
        %v673 = vmul.f32 %v672, 0.6931472
        %v674 = vlog2.pop %v657
        %v675 = vmul.f32 %v674, 0.6931472
        %v676 = vlog2.pop %v658
        %v677 = vmul.f32 %v676, 0.6931472
        %v678 = vlog2.pop %v659
        %v679 = vmul.f32 %v678, 0.6931472
        %v680 = vlog2.pop %v660
        %v681 = vmul.f32 %v680, 0.6931472
        %v682 = vlog2.pop %v661
        %v683 = vmul.f32 %v682, 0.6931472
        %v684 = vlog2.pop %v662
        %v685 = vmul.f32 %v684, 0.6931472
        %v686 = vlog2.pop %v663
        %v687 = vmul.f32 %v686, 0.6931472
        %v688 = vlog2.pop %v664
        %v689 = vmul.f32 %v688, 0.6931472
        %v690 = vlog2.pop %v665
        %v691 = vmul.f32 %v690, 0.6931472
        %v692 = vlog2.pop %v666
        %v693 = vmul.f32 %v692, 0.6931472
        %v694 = vlog2.pop %v667
        %v695 = vmul.f32 %v694, 0.6931472
        %v696 = vlog2.pop %v668
        %v697 = vmul.f32 %v696, 0.6931472
        %v698 = vlog2.pop %v669
        %v699 = vmul.f32 %v698, 0.6931472
        %v700 = vlog2.pop %v670
        %v701 = vmul.f32 %v700, 0.6931472
        %v702 = vlog2.pop %v671
        %v703 = vmul.f32 %v702, 0.6931472
        %v704 = vperm.slane %v655, 0
        %v705 = vmul.f32 %v704, %v673
        %v706 = vmul.f32 %v704, %v675
        %v707 = vmul.f32 %v704, %v677
        %v708 = vmul.f32 %v704, %v679
        %v709 = vmul.f32 %v704, %v681
        %v710 = vmul.f32 %v704, %v683
        %v711 = vmul.f32 %v704, %v685
        %v712 = vmul.f32 %v704, %v687
        %v713 = vmul.f32 %v704, %v689
        %v714 = vmul.f32 %v704, %v691
        %v715 = vmul.f32 %v704, %v693
        %v716 = vmul.f32 %v704, %v695
        %v717 = vmul.f32 %v704, %v697
        %v718 = vmul.f32 %v704, %v699
        %v719 = vmul.f32 %v704, %v701
        %v720 = vmul.f32 %v704, %v703
        %v721 = vmul.f32 %v705, 1.442695
        %v722 = vpow.pop %v721
        %v723 = vmul.f32 %v706, 1.442695
        %v724 = vpow.pop %v723
        %v725 = vmul.f32 %v707, 1.442695
        %v726 = vpow.pop %v725
        %v727 = vmul.f32 %v708, 1.442695
        %v728 = vpow.pop %v727
        %v729 = vmul.f32 %v709, 1.442695
        %v730 = vpow.pop %v729
        %v731 = vmul.f32 %v710, 1.442695
        %v732 = vpow.pop %v731
        %v733 = vmul.f32 %v711, 1.442695
        %v734 = vpow.pop %v733
        %v735 = vmul.f32 %v712, 1.442695
        %v736 = vpow.pop %v735
        %v737 = vmul.f32 %v713, 1.442695
        %v738 = vpow.pop %v737
        %v739 = vmul.f32 %v714, 1.442695
        %v740 = vpow.pop %v739
        %v741 = vmul.f32 %v715, 1.442695
        %v742 = vpow.pop %v741
        %v743 = vmul.f32 %v716, 1.442695
        %v744 = vpow.pop %v743
        %v745 = vmul.f32 %v717, 1.442695
        %v746 = vpow.pop %v745
        %v747 = vmul.f32 %v718, 1.442695
        %v748 = vpow.pop %v747
        %v749 = vmul.f32 %v719, 1.442695
        %v750 = vpow.pop %v749
        %v751 = vmul.f32 %v720, 1.442695
        %v752 = vpow.pop %v751
        %v753 = vmul.f32 %v205, %v722
        %v754 = vmul.f32 %v206, %v724
        %v755 = vmul.f32 %v207, %v726
        %v756 = vmul.f32 %v208, %v728
        %v757 = vmul.f32 %v209, %v730
        %v758 = vmul.f32 %v210, %v732
        %v759 = vmul.f32 %v211, %v734
        %v760 = vmul.f32 %v212, %v736
        %v761 = vmul.f32 %v213, %v738
        %v762 = vmul.f32 %v214, %v740
        %v763 = vmul.f32 %v215, %v742
        %v764 = vmul.f32 %v216, %v744
        %v765 = vmul.f32 %v217, %v746
        %v766 = vmul.f32 %v218, %v748
        %v767 = vmul.f32 %v219, %v750
        %v768 = vmul.f32 %v220, %v752
        %v769 = vperm.slane %v223, 0
        %v770 = vadd.f32 %v753, %v769
        %v771 = vadd.f32 %v754, %v769
        %v772 = vadd.f32 %v755, %v769
        %v773 = vadd.f32 %v756, %v769
        %v774 = vadd.f32 %v757, %v769
        %v775 = vadd.f32 %v758, %v769
        %v776 = vadd.f32 %v759, %v769
        %v777 = vadd.f32 %v760, %v769
        %v778 = vadd.f32 %v761, %v769
        %v779 = vadd.f32 %v762, %v769
        %v780 = vadd.f32 %v763, %v769
        %v781 = vadd.f32 %v764, %v769
        %v782 = vadd.f32 %v765, %v769
        %v783 = vadd.f32 %v766, %v769
        %v784 = vadd.f32 %v767, %v769
        %v785 = vadd.f32 %v768, %v769
        %v786 = vrsqrt.pop %v770
        %v787 = vmul.f32 %v786, %v770
        %v788 = vmul.f32 %v787, %v786
        %v789 = vmul.f32 0.5, %v788
        %v790 = vsub.f32 1.5, %v789
        %v791 = vmul.f32 %v786, %v790
        %v792 = vmul.f32 %v770, %v791
        %vm793 = vcmp.eq.f32.partialorder %v770, inf
        %v794 = vsel %vm793, %v770, %v792
        %vm795 = vcmp.eq.f32.partialorder %v770, 0.0
        %v796 = vand.u32 %v770, 2147483648
        %v797 = vsel %vm795, %v796, %v794
        %v798 = vrsqrt.pop %v771
        %v799 = vmul.f32 %v798, %v771
        %v800 = vmul.f32 %v799, %v798
        %v801 = vmul.f32 0.5, %v800
        %v802 = vsub.f32 1.5, %v801
        %v803 = vmul.f32 %v798, %v802
        %v804 = vmul.f32 %v771, %v803
        %vm805 = vcmp.eq.f32.partialorder %v771, inf
        %v806 = vsel %vm805, %v771, %v804
        %vm807 = vcmp.eq.f32.partialorder %v771, 0.0
        %v808 = vand.u32 %v771, 2147483648
        %v809 = vsel %vm807, %v808, %v806
        %v810 = vrsqrt.pop %v772
        %v811 = vmul.f32 %v810, %v772
        %v812 = vmul.f32 %v811, %v810
        %v813 = vmul.f32 0.5, %v812
        %v814 = vsub.f32 1.5, %v813
        %v815 = vmul.f32 %v810, %v814
        %v816 = vmul.f32 %v772, %v815
        %vm817 = vcmp.eq.f32.partialorder %v772, inf
        %v818 = vsel %vm817, %v772, %v816
        %vm819 = vcmp.eq.f32.partialorder %v772, 0.0
        %v820 = vand.u32 %v772, 2147483648
        %v821 = vsel %vm819, %v820, %v818
        %v822 = vrsqrt.pop %v773
        %v823 = vmul.f32 %v822, %v773
        %v824 = vmul.f32 %v823, %v822
        %v825 = vmul.f32 0.5, %v824
        %v826 = vsub.f32 1.5, %v825
        %v827 = vmul.f32 %v822, %v826
        %v828 = vmul.f32 %v773, %v827
        %vm829 = vcmp.eq.f32.partialorder %v773, inf
        %v830 = vsel %vm829, %v773, %v828
        %vm831 = vcmp.eq.f32.partialorder %v773, 0.0
        %v832 = vand.u32 %v773, 2147483648
        %v833 = vsel %vm831, %v832, %v830
        %v834 = vrsqrt.pop %v774
        %v835 = vmul.f32 %v834, %v774
        %v836 = vmul.f32 %v835, %v834
        %v837 = vmul.f32 0.5, %v836
        %v838 = vsub.f32 1.5, %v837
        %v839 = vmul.f32 %v834, %v838
        %v840 = vmul.f32 %v774, %v839
        %vm841 = vcmp.eq.f32.partialorder %v774, inf
        %v842 = vsel %vm841, %v774, %v840
        %vm843 = vcmp.eq.f32.partialorder %v774, 0.0
        %v844 = vand.u32 %v774, 2147483648
        %v845 = vsel %vm843, %v844, %v842
        %v846 = vrsqrt.pop %v775
        %v847 = vmul.f32 %v846, %v775
        %v848 = vmul.f32 %v847, %v846
        %v849 = vmul.f32 0.5, %v848
        %v850 = vsub.f32 1.5, %v849
        %v851 = vmul.f32 %v846, %v850
        %v852 = vmul.f32 %v775, %v851
        %vm853 = vcmp.eq.f32.partialorder %v775, inf
        %v854 = vsel %vm853, %v775, %v852
        %vm855 = vcmp.eq.f32.partialorder %v775, 0.0
        %v856 = vand.u32 %v775, 2147483648
        %v857 = vsel %vm855, %v856, %v854
        %v858 = vrsqrt.pop %v776
        %v859 = vmul.f32 %v858, %v776
        %v860 = vmul.f32 %v859, %v858
        %v861 = vmul.f32 0.5, %v860
        %v862 = vsub.f32 1.5, %v861
        %v863 = vmul.f32 %v858, %v862
        %v864 = vmul.f32 %v776, %v863
        %vm865 = vcmp.eq.f32.partialorder %v776, inf
        %v866 = vsel %vm865, %v776, %v864
        %vm867 = vcmp.eq.f32.partialorder %v776, 0.0
        %v868 = vand.u32 %v776, 2147483648
        %v869 = vsel %vm867, %v868, %v866
        %v870 = vrsqrt.pop %v777
        %v871 = vmul.f32 %v870, %v777
        %v872 = vmul.f32 %v871, %v870
        %v873 = vmul.f32 0.5, %v872
        %v874 = vsub.f32 1.5, %v873
        %v875 = vmul.f32 %v870, %v874
        %v876 = vmul.f32 %v777, %v875
        %vm877 = vcmp.eq.f32.partialorder %v777, inf
        %v878 = vsel %vm877, %v777, %v876
        %vm879 = vcmp.eq.f32.partialorder %v777, 0.0
        %v880 = vand.u32 %v777, 2147483648
        %v881 = vsel %vm879, %v880, %v878
        %v882 = vrsqrt.pop %v778
        %v883 = vmul.f32 %v882, %v778
        %v884 = vmul.f32 %v883, %v882
        %v885 = vmul.f32 0.5, %v884
        %v886 = vsub.f32 1.5, %v885
        %v887 = vmul.f32 %v882, %v886
        %v888 = vmul.f32 %v778, %v887
        %vm889 = vcmp.eq.f32.partialorder %v778, inf
        %v890 = vsel %vm889, %v778, %v888
        %vm891 = vcmp.eq.f32.partialorder %v778, 0.0
        %v892 = vand.u32 %v778, 2147483648
        %v893 = vsel %vm891, %v892, %v890
        %v894 = vrsqrt.pop %v779
        %v895 = vmul.f32 %v894, %v779
        %v896 = vmul.f32 %v895, %v894
        %v897 = vmul.f32 0.5, %v896
        %v898 = vsub.f32 1.5, %v897
        %v899 = vmul.f32 %v894, %v898
        %v900 = vmul.f32 %v779, %v899
        %vm901 = vcmp.eq.f32.partialorder %v779, inf
        %v902 = vsel %vm901, %v779, %v900
        %vm903 = vcmp.eq.f32.partialorder %v779, 0.0
        %v904 = vand.u32 %v779, 2147483648
        %v905 = vsel %vm903, %v904, %v902
        %v906 = vrsqrt.pop %v780
        %v907 = vmul.f32 %v906, %v780
        %v908 = vmul.f32 %v907, %v906
        %v909 = vmul.f32 0.5, %v908
        %v910 = vsub.f32 1.5, %v909
        %v911 = vmul.f32 %v906, %v910
        %v912 = vmul.f32 %v780, %v911
        %vm913 = vcmp.eq.f32.partialorder %v780, inf
        %v914 = vsel %vm913, %v780, %v912
        %vm915 = vcmp.eq.f32.partialorder %v780, 0.0
        %v916 = vand.u32 %v780, 2147483648
        %v917 = vsel %vm915, %v916, %v914
        %v918 = vrsqrt.pop %v781
        %v919 = vmul.f32 %v918, %v781
        %v920 = vmul.f32 %v919, %v918
        %v921 = vmul.f32 0.5, %v920
        %v922 = vsub.f32 1.5, %v921
        %v923 = vmul.f32 %v918, %v922
        %v924 = vmul.f32 %v781, %v923
        %vm925 = vcmp.eq.f32.partialorder %v781, inf
        %v926 = vsel %vm925, %v781, %v924
        %vm927 = vcmp.eq.f32.partialorder %v781, 0.0
        %v928 = vand.u32 %v781, 2147483648
        %v929 = vsel %vm927, %v928, %v926
        %v930 = vrsqrt.pop %v782
        %v931 = vmul.f32 %v930, %v782
        %v932 = vmul.f32 %v931, %v930
        %v933 = vmul.f32 0.5, %v932
        %v934 = vsub.f32 1.5, %v933
        %v935 = vmul.f32 %v930, %v934
        %v936 = vmul.f32 %v782, %v935
        %vm937 = vcmp.eq.f32.partialorder %v782, inf
        %v938 = vsel %vm937, %v782, %v936
        %vm939 = vcmp.eq.f32.partialorder %v782, 0.0
        %v940 = vand.u32 %v782, 2147483648
        %v941 = vsel %vm939, %v940, %v938
        %v942 = vrsqrt.pop %v783
        %v943 = vmul.f32 %v942, %v783
        %v944 = vmul.f32 %v943, %v942
        %v945 = vmul.f32 0.5, %v944
        %v946 = vsub.f32 1.5, %v945
        %v947 = vmul.f32 %v942, %v946
        %v948 = vmul.f32 %v783, %v947
        %vm949 = vcmp.eq.f32.partialorder %v783, inf
        %v950 = vsel %vm949, %v783, %v948
        %vm951 = vcmp.eq.f32.partialorder %v783, 0.0
        %v952 = vand.u32 %v783, 2147483648
        %v953 = vsel %vm951, %v952, %v950
        %v954 = vrsqrt.pop %v784
        %v955 = vmul.f32 %v954, %v784
        %v956 = vmul.f32 %v955, %v954
        %v957 = vmul.f32 0.5, %v956
        %v958 = vsub.f32 1.5, %v957
        %v959 = vmul.f32 %v954, %v958
        %v960 = vmul.f32 %v784, %v959
        %vm961 = vcmp.eq.f32.partialorder %v784, inf
        %v962 = vsel %vm961, %v784, %v960
        %vm963 = vcmp.eq.f32.partialorder %v784, 0.0
        %v964 = vand.u32 %v784, 2147483648
        %v965 = vsel %vm963, %v964, %v962
        %v966 = vrsqrt.pop %v785
        %v967 = vmul.f32 %v966, %v785
        %v968 = vmul.f32 %v967, %v966
        %v969 = vmul.f32 0.5, %v968
        %v970 = vsub.f32 1.5, %v969
        %v971 = vmul.f32 %v966, %v970
        %v972 = vmul.f32 %v785, %v971
        %vm973 = vcmp.eq.f32.partialorder %v785, inf
        %v974 = vsel %vm973, %v785, %v972
        %vm975 = vcmp.eq.f32.partialorder %v785, 0.0
        %v976 = vand.u32 %v785, 2147483648
        %v977 = vsel %vm975, %v976, %v974
        %v978 = vperm.slane %v224, 0
        %v979 = vsub.f32 %v797, %v978
        %v980 = vsub.f32 %v809, %v978
        %v981 = vsub.f32 %v821, %v978
        %v982 = vsub.f32 %v833, %v978
        %v983 = vsub.f32 %v845, %v978
        %v984 = vsub.f32 %v857, %v978
        %v985 = vsub.f32 %v869, %v978
        %v986 = vsub.f32 %v881, %v978
        %v987 = vsub.f32 %v893, %v978
        %v988 = vsub.f32 %v905, %v978
        %v989 = vsub.f32 %v917, %v978
        %v990 = vsub.f32 %v929, %v978
        %v991 = vsub.f32 %v941, %v978
        %v992 = vsub.f32 %v953, %v978
        %v993 = vsub.f32 %v965, %v978
        %v994 = vsub.f32 %v977, %v978
        %995 = vst [vmem:[%s202] sm:$0xff] %v979
        %996 = vst [vmem:[%s202 + $0x8] sm:$0xff] %v980
        %997 = vst [vmem:[%s202 + $0x10] sm:$0xff] %v981
        %998 = vst [vmem:[%s202 + $0x18] sm:$0xff] %v982
        %999 = vst [vmem:[%s202 + $0x20] sm:$0xff] %v983
        %1000 = vst [vmem:[%s202 + $0x28] sm:$0xff] %v984
        %1001 = vst [vmem:[%s202 + $0x30] sm:$0xff] %v985
        %1002 = vst [vmem:[%s202 + $0x38] sm:$0xff] %v986
        %1003 = vst [vmem:[%s202 + $0x40] sm:$0xff] %v987
        %1004 = vst [vmem:[%s202 + $0x48] sm:$0xff] %v988
        %1005 = vst [vmem:[%s202 + $0x50] sm:$0xff] %v989
        %1006 = vst [vmem:[%s202 + $0x58] sm:$0xff] %v990
        %1007 = vst [vmem:[%s202 + $0x60] sm:$0xff] %v991
        %1008 = vst [vmem:[%s202 + $0x68] sm:$0xff] %v992
        %1009 = vst [vmem:[%s202 + $0x70] sm:$0xff] %v993
        %1010 = vst [vmem:[%s202 + $0x78] sm:$0xff] %v994
        %s1011 = sand.u32 %s96, 1
        %s1012 = scalar_lea.sflag [#allocation5], %s1011
        %s1013 = sand.u32 %s96, 1
        %s1014 = smul.addr %s1013, 128
        %s1015 = scalar_lea.vmem [#allocation8], %s1014
        // Predicated region
        $region41: #{tpu_custom_call.1} parent=27 // pred_check
          %p1016 = pneg %p106
        $region42: #{tpu_custom_call.1} parent=27 // pred_check_branch
          %1018 = sbr.rel (%p1016) target = $region44
        $region43: #{tpu_custom_call.1} parent=27 // pred_region
          %s1019 = smul.u32 16, %s25
          %1021 = vsyncadd %s1012, 0
          %s1022 = sadd.s32 %s24, %s1019
          %s1023 = smul.addr %s1022, 8
          %s1024 = scalar_lea.hbm %s2, %s1023
          %s1025 = sshll.u32 %s1015, 4
          %s1026 = int_to_ptr.vmem [resolvable:$true] %s1025
          %s1027 = sshll.u32 %s1024, 4
          %s1028 = int_to_ptr.hbm [resolvable:$true] %s1027
          %1033 = dma.vmem_to_hbm [thread:$0]  %s1026, 2048, %s1028, %s1012, 128, 128, 8
        $region44: #{tpu_custom_call.1} parent=27 // pred_fallthru
          _
      $region28: #{tpu_custom_call.1} parent=5 // pred_fallthru
        _
      %p1034 = scmp.le.s32.totalorder 2, %s15
      // Predicated region
      $region45: #{tpu_custom_call.1} parent=5 // pred_check
        %p1035 = pneg %p1034
      $region46: #{tpu_custom_call.1} parent=5 // pred_check_branch
        %1037 = sbr.rel (%p1035) target = $region48
      $region47: #{tpu_custom_call.1} parent=5 // pred_region
        %s1038 = ssub.s32 %s15, 2
        // Predicated region
        $region49: #{tpu_custom_call.1} parent=47 // pred_check
          %p1039 = pneg %p112
        $region50: #{tpu_custom_call.1} parent=47 // pred_check_branch
          %1041 = sbr.rel (%p1039) target = $region52
        $region51: #{tpu_custom_call.1} parent=47 // pred_region
          %s1042 = sand.u32 %s97, 1
          %s1043 = scalar_lea.sflag [#allocation5], %s1042
          %s1044 = sand.u32 %s97, 1
          %s1045 = smul.addr %s1044, 128
          %s1046 = scalar_lea.vmem [#allocation8], %s1045
          %1048 = dma.done %s1043, 2048
        $region52: #{tpu_custom_call.1} parent=47 // pred_fallthru
          _
      $region48: #{tpu_custom_call.1} parent=5 // pred_fallthru
        _
    $region6: #{tpu_custom_call.1} parent=1 // loop_footer
      %s19 = sadd.s32 1, %s15
    $region7: #{tpu_custom_call.1} parent=1 // loop_footer_branch
      %14 = sbr.rel target = $region3
    $region8: #{tpu_custom_call.1} parent=1 // loop_exit
      _
    %1049 = vsyncpa [#allocation4], 1
    %s1050 = scalar_lea.sflag [#allocation4], 1
    %1051 = vsyncpa %s1050, 1
    %1052 = vsyncpa [#allocation7], 1
    %s1053 = scalar_lea.sflag [#allocation7], 1
    %1054 = vsyncpa %s1053, 1
    %1055 = vsyncpa [#allocation5], 1
    %s1056 = scalar_lea.sflag [#allocation5], 1
    %1057 = vsyncpa %s1056, 1

</llo_original>
